<compile_context>
chip_gen: v5e
topology: v5e:2x2
jax: 0.10.0
libtpu: 0.0.40
codegen_flags: <defaults>
</compile_context>

<pallas_src>
import numpy as np
import jax
import jax.numpy as jnp
from jax.experimental import pallas as pl
from jax.experimental.pallas import tpu as pltpu

# ---------------- config (small, consistent with the module) ----------------
B = 2            # batch
S = 8            # sequence length (== maxlen, all tokens valid)
BS = B * S
EMB_DIM = 32
POS_DIM = 8
NER_DIM = 8
IN_DIM = EMB_DIM + POS_DIM + NER_DIM   # 48
HIDDEN = 32      # opt['hidden_dim'] == mem_dim
VOCAB = 50
N_POS = 10
N_NER = 6
NEG_INF = 1e12   # constant.INFINITY_NUMBER
# pooling == 'max', prune_k == -1, num_layers == 2, mlp_layers == 2,
# no rnn, eval mode (dropout = identity)


# ---------------------------- fused Pallas kernel ----------------------------
def gcn_relation_kernel(a_ref, x_ref, b0_ref, b1_ref, mask_ref,
                        w0_ref, w1_ref, mw1_ref, mb1_ref, mw2_ref, mb2_ref,
                        out_ref):
    a = a_ref[...]                                    # (BS, BS) bf16, block-diag D^-1(A+I)

    # --- GCN layer 0:  h = relu(A' @ (x @ W0) + 2*b0/denom) ---
    xw = jnp.dot(x_ref[...], w0_ref[...],
                 preferred_element_type=jnp.float32)               # (BS, H) f32
    h = jnp.maximum(
        jnp.dot(a, xw.astype(jnp.bfloat16),
                preferred_element_type=jnp.float32) + b0_ref[...], 0.0)

    # --- GCN layer 1 ---
    hw = jnp.dot(h.astype(jnp.bfloat16), w1_ref[...],
                 preferred_element_type=jnp.float32)
    h = jnp.maximum(
        jnp.dot(a, hw.astype(jnp.bfloat16),
                preferred_element_type=jnp.float32) + b1_ref[...], 0.0)

    # --- max pooling: one lane-replicate + one additive -INF mask + one max ---
    h3 = jnp.concatenate([h, h, h], axis=-1) + mask_ref[...]       # (BS, 3H) f32
    pooled = jnp.max(h3.reshape(B, S, 3 * HIDDEN), axis=1)         # (B, 3H)

    # --- out MLP: single (3H, H) matmul, then (H, H) ---
    z = jnp.dot(pooled.astype(jnp.bfloat16), mw1_ref[...],
                preferred_element_type=jnp.float32) + mb1_ref[...]
    z = jnp.maximum(z, 0.0)
    z = jnp.dot(z.astype(jnp.bfloat16), mw2_ref[...],
                preferred_element_type=jnp.float32) + mb2_ref[...]
    out = jnp.maximum(z, 0.0)                                      # (B, H)

    # single lane-dense writeback: [outputs | h_out]
    out_ref[...] = jnp.concatenate([out, pooled[:, :HIDDEN]], axis=-1)


def gcn_relation_forward(a_norm, x, bias0, bias1, mask_add,
                         w0, w1, mw1, mb1, mw2, mb2):
    # whole problem fits trivially in VMEM -> no grid, full-array blocks
    return pl.pallas_call(
        gcn_relation_kernel,
        out_shape=jax.ShapeDtypeStruct((B, 2 * HIDDEN), jnp.float32),
        in_specs=[pl.BlockSpec(memory_space=pltpu.MemorySpace.VMEM)
                  for _ in range(11)],
        out_specs=pl.BlockSpec(memory_space=pltpu.MemorySpace.VMEM),
    )(a_norm, x, bias0, bias1, mask_add, w0, w1, mw1, mb1, mw2, mb2)


# -------------------- host-side glue (tree -> adjacency) --------------------
def heads_to_adj(head_np, lens, maxlen):
    """prune_k < 0 path of head_to_tree + tree_to_adj(directed=False)."""
    bsz = head_np.shape[0]
    adj = np.zeros((bsz, maxlen, maxlen), dtype=np.float32)
    for b in range(bsz):
        for i in range(int(lens[b])):
            h = int(head_np[b, i])
            if h > 0:
                adj[b, h - 1, i] = 1.0          # parent -> child edge
        adj[b] = adj[b] + adj[b].T              # undirected, no self-loop
    return adj


def linear_params(key, fan_in, fan_out):
    kw, kb = jax.random.split(key)
    bound = 1.0 / np.sqrt(fan_in)
    w = jax.random.uniform(kw, (fan_in, fan_out), minval=-bound, maxval=bound)
    b = jax.random.uniform(kb, (1, fan_out), minval=-bound, maxval=bound)
    return w.astype(jnp.float32), b.astype(jnp.float32)


# --------------------------- pure-JAX reference ------------------------------
def reference(adj, x, pool_m, subj_m, obj_m,
              w0, b0, w1, b1, mw1, mb1, mw2, mb2):
    # exact PyTorch operation order (W(Ax)+b + W(x)+b, divide by denom), f32
    denom = adj.sum(2)[..., None] + 1.0
    h = x
    for (w, b) in ((w0, b0), (w1, b1)):
        ax = jnp.einsum('bij,bjd->bid', adj, h)
        axw = ax @ w + b + h @ w + b
        h = jax.nn.relu(axw / denom)

    def pmax(hh, m):
        return jnp.max(jnp.where(m, -NEG_INF, hh), axis=1)

    h_out = pmax(h, pool_m)
    s_out = pmax(h, subj_m)
    o_out = pmax(h, obj_m)
    cat = jnp.concatenate([h_out, s_out, o_out], axis=1)
    out = jax.nn.relu(jax.nn.relu(cat @ mw1 + mb1) @ mw2 + mb2)
    return out, h_out


# --------------------------------- main --------------------------------------
if __name__ == "__main__":
    key = jax.random.PRNGKey(0)
    ks = jax.random.split(key, 10)

    # ---- parameters (deterministic, synthetic) ----
    emb_w = jax.random.uniform(ks[0], (VOCAB, EMB_DIM), minval=-1.0, maxval=1.0)
    emb_w = emb_w.at[0].set(0.0)                 # padding_idx = PAD_ID = 0
    pos_w = jax.random.normal(ks[1], (N_POS, POS_DIM)) * 0.1
    ner_w = jax.random.normal(ks[2], (N_NER, NER_DIM)) * 0.1
    w0, b0 = linear_params(ks[3], IN_DIM, HIDDEN)         # GCN layer 0
    w1, b1 = linear_params(ks[4], HIDDEN, HIDDEN)         # GCN layer 1
    mw1, mb1 = linear_params(ks[5], 3 * HIDDEN, HIDDEN)   # out_mlp layer 0
    mw2, mb2 = linear_params(ks[6], HIDDEN, HIDDEN)       # out_mlp layer 1

    # ---- example inputs ----
    words = jax.random.randint(ks[7], (B, S), 1, VOCAB)
    pos = jax.random.randint(ks[8], (B, S), 0, N_POS)
    ner = jax.random.randint(ks[9], (B, S), 0, N_NER)
    masks = np.zeros((B, S), dtype=np.int64)            # 0 == valid token
    lens = (masks == 0).sum(1)                          # all S
    maxlen = int(lens.max())

    # dependency heads: token 0 is root, every other token attaches to an
    # earlier token (1-based parent index) -> valid tree
    head_np = np.zeros((B, S), dtype=np.int64)
    rng = np.random.RandomState(0)
    for b in range(B):
        for i in range(1, S):
            head_np[b, i] = rng.randint(1, i + 1)

    # relative subject/object positions (0 marks the entity token)
    subj_pos = np.tile(np.arange(S)[None, :] - 1, (B, 1))   # subject at idx 1
    obj_pos = np.tile(np.arange(S)[None, :] - 3, (B, 1))    # object at idx 3
    # TODO(synk): deprel / subj_type / obj_type are unused by the forward pass.

    # ---- adjacency + derived quantities (host glue, matches the module) ----
    adj_np = heads_to_adj(head_np, lens, maxlen)                     # (B, S, S)
    denom_np = adj_np.sum(axis=2, keepdims=True) + 1.0               # (B, S, 1)
    pool_mask_np = (adj_np.sum(axis=2) + adj_np.sum(axis=1)) == 0.0  # (B, S) bool
    subj_mask_np = subj_pos != 0                                     # (B, S) bool
    obj_mask_np = obj_pos != 0

    # block-diagonal pre-normalized adjacency  A' = D^{-1}(A + I)  (B*S, B*S)
    a_norm_np = np.zeros((BS, BS), dtype=np.float32)
    eye = np.eye(S, dtype=np.float32)
    for b in range(B):
        a_norm_np[b * S:(b + 1) * S, b * S:(b + 1) * S] = \
            (adj_np[b] + eye) / denom_np[b]

    # pre-scaled GCN biases  2*b_l/denom  flattened to (B*S, H)
    inv_d = (1.0 / denom_np).astype(np.float32)                      # (B, S, 1)
    bias0_np = (2.0 * inv_d * np.asarray(b0)).reshape(BS, HIDDEN).astype(np.float32)
    bias1_np = (2.0 * inv_d * np.asarray(b1)).reshape(BS, HIDDEN).astype(np.float32)

    # additive -INF pooling masks, pre-broadcast to lane width, stacked (B*S, 3H)
    def add_mask(m):   # (B, S) bool -> (B, S, HIDDEN) additive bias
        return (np.where(m, -NEG_INF, 0.0).astype(np.float32)[..., None]
                * np.ones((1, 1, HIDDEN), np.float32))
    mask_add_np = np.concatenate(
        [add_mask(pool_mask_np), add_mask(subj_mask_np), add_mask(obj_mask_np)],
        axis=-1).reshape(BS, 3 * HIDDEN)

    # ---- embedding lookups + concat (glue) ----
    x = jnp.concatenate(
        [emb_w[words], pos_w[pos], ner_w[ner]], axis=-1).astype(jnp.float32)

    # ---- fused Pallas kernel: GCN layers + pooling + out MLP ----
    bf = jnp.bfloat16
    fused = gcn_relation_forward(
        jnp.asarray(a_norm_np).astype(bf),         # MXU operands in bf16
        x.reshape(BS, IN_DIM).astype(bf),
        jnp.asarray(bias0_np), jnp.asarray(bias1_np), jnp.asarray(mask_add_np),
        w0.astype(bf), w1.astype(bf), mw1.astype(bf), mb1,
        mw2.astype(bf), mb2)
    fused = jax.block_until_ready(fused)
    outputs = fused[:, :HIDDEN]
    h_out = fused[:, HIDDEN:]

    # ---- correctness check against f32 pure-JAX reference ----
    # (bf16 MXU operands + reassociated summation -> loosened tolerance)
    ref_out, ref_h = reference(
        jnp.asarray(adj_np), x,
        jnp.asarray(pool_mask_np)[..., None],
        jnp.asarray(subj_mask_np)[..., None],
        jnp.asarray(obj_mask_np)[..., None],
        w0, b0, w1, b1, mw1, mb1, mw2, mb2)
    np.testing.assert_allclose(np.asarray(outputs), np.asarray(ref_out),
                               rtol=5e-2, atol=5e-2)
    np.testing.assert_allclose(np.asarray(h_out), np.asarray(ref_h),
                               rtol=5e-2, atol=5e-2)

    print("KERNEL_OK")
</pallas_src>

<mosaic_0001>
module attributes {stable_mosaic.version = 11 : i64} {
  func.func @gcn_relation_kernel(%arg0: memref<16x16xbf16, #tpu.memory_space<vmem>>, %arg1: memref<16x48xbf16, #tpu.memory_space<vmem>>, %arg2: memref<16x32xf32, #tpu.memory_space<vmem>>, %arg3: memref<16x32xf32, #tpu.memory_space<vmem>>, %arg4: memref<16x96xf32, #tpu.memory_space<vmem>>, %arg5: memref<48x32xbf16, #tpu.memory_space<vmem>>, %arg6: memref<32x32xbf16, #tpu.memory_space<vmem>>, %arg7: memref<96x32xbf16, #tpu.memory_space<vmem>>, %arg8: memref<1x32xf32, #tpu.memory_space<vmem>>, %arg9: memref<32x32xbf16, #tpu.memory_space<vmem>>, %arg10: memref<1x32xf32, #tpu.memory_space<vmem>>, %arg11: memref<2x64xf32, #tpu.memory_space<vmem>>) attributes {dimension_semantics = [], scalar_prefetch = 0 : i64, scratch_operands = 0 : i64, tpu.core_type = #tpu.core_type<tc>} {
    %c0 = arith.constant 0 : index
    %c0_0 = arith.constant 0 : index
    %0 = vector.load %arg0[%c0, %c0_0] : memref<16x16xbf16, #tpu.memory_space<vmem>>, vector<16x16xbf16>
    %c0_1 = arith.constant 0 : index
    %c0_2 = arith.constant 0 : index
    %1 = vector.load %arg1[%c0_1, %c0_2] : memref<16x48xbf16, #tpu.memory_space<vmem>>, vector<16x48xbf16>
    %c0_3 = arith.constant 0 : index
    %c0_4 = arith.constant 0 : index
    %2 = vector.load %arg5[%c0_3, %c0_4] : memref<48x32xbf16, #tpu.memory_space<vmem>>, vector<48x32xbf16>
    %cst = arith.constant dense<0.000000e+00> : vector<16x32xf32>
    %3 = tpu.matmul %1, %2, %cst {dimension_numbers = #tpu.dot_dimension_numbers<[1], [0], [0], [1], [0, 0, 1, 1], [], []>} : vector<16x48xbf16>, vector<48x32xbf16>, vector<16x32xf32> -> vector<16x32xf32>
    %4 = arith.truncf %3 : vector<16x32xf32> to vector<16x32xbf16>
    %cst_5 = arith.constant dense<0.000000e+00> : vector<16x32xf32>
    %5 = tpu.matmul %0, %4, %cst_5 {dimension_numbers = #tpu.dot_dimension_numbers<[1], [0], [0], [1], [0, 0, 1, 1], [], []>} : vector<16x16xbf16>, vector<16x32xbf16>, vector<16x32xf32> -> vector<16x32xf32>
    %c0_6 = arith.constant 0 : index
    %c0_7 = arith.constant 0 : index
    %6 = vector.load %arg2[%c0_6, %c0_7] : memref<16x32xf32, #tpu.memory_space<vmem>>, vector<16x32xf32>
    %7 = arith.addf %5, %6 : vector<16x32xf32>
    %cst_8 = arith.constant 0.000000e+00 : f32
    %8 = vector.broadcast %cst_8 : f32 to vector<16x32xf32>
    %9 = arith.maximumf %7, %8 : vector<16x32xf32>
    %10 = arith.truncf %9 : vector<16x32xf32> to vector<16x32xbf16>
    %c0_9 = arith.constant 0 : index
    %c0_10 = arith.constant 0 : index
    %11 = vector.load %arg6[%c0_9, %c0_10] : memref<32x32xbf16, #tpu.memory_space<vmem>>, vector<32x32xbf16>
    %cst_11 = arith.constant dense<0.000000e+00> : vector<16x32xf32>
    %12 = tpu.matmul %10, %11, %cst_11 {dimension_numbers = #tpu.dot_dimension_numbers<[1], [0], [0], [1], [0, 0, 1, 1], [], []>} : vector<16x32xbf16>, vector<32x32xbf16>, vector<16x32xf32> -> vector<16x32xf32>
    %13 = arith.truncf %12 : vector<16x32xf32> to vector<16x32xbf16>
    %cst_12 = arith.constant dense<0.000000e+00> : vector<16x32xf32>
    %14 = tpu.matmul %0, %13, %cst_12 {dimension_numbers = #tpu.dot_dimension_numbers<[1], [0], [0], [1], [0, 0, 1, 1], [], []>} : vector<16x16xbf16>, vector<16x32xbf16>, vector<16x32xf32> -> vector<16x32xf32>
    %c0_13 = arith.constant 0 : index
    %c0_14 = arith.constant 0 : index
    %15 = vector.load %arg3[%c0_13, %c0_14] : memref<16x32xf32, #tpu.memory_space<vmem>>, vector<16x32xf32>
    %16 = arith.addf %14, %15 : vector<16x32xf32>
    %cst_15 = arith.constant 0.000000e+00 : f32
    %17 = vector.broadcast %cst_15 : f32 to vector<16x32xf32>
    %18 = arith.maximumf %16, %17 : vector<16x32xf32>
    %19 = tpu.concatenate %18, %18, %18 in 1 : vector<16x32xf32>, vector<16x32xf32>, vector<16x32xf32> -> vector<16x96xf32>
    %c0_16 = arith.constant 0 : index
    %c0_17 = arith.constant 0 : index
    %20 = vector.load %arg4[%c0_16, %c0_17] : memref<16x96xf32, #tpu.memory_space<vmem>>, vector<16x96xf32>
    %21 = arith.addf %19, %20 : vector<16x96xf32>
    %22 = vector.shape_cast %21 : vector<16x96xf32> to vector<2x8x96xf32>
    %cst_18 = arith.constant dense<0xFF800000> : vector<2x96xf32>
    %23 = vector.multi_reduction <maximumf>, %22, %cst_18 [1] : vector<2x8x96xf32> to vector<2x96xf32>
    %24 = arith.truncf %23 : vector<2x96xf32> to vector<2x96xbf16>
    %c0_19 = arith.constant 0 : index
    %c0_20 = arith.constant 0 : index
    %25 = vector.load %arg7[%c0_19, %c0_20] : memref<96x32xbf16, #tpu.memory_space<vmem>>, vector<96x32xbf16>
    %cst_21 = arith.constant dense<0.000000e+00> : vector<2x32xf32>
    %26 = tpu.matmul %24, %25, %cst_21 {dimension_numbers = #tpu.dot_dimension_numbers<[1], [0], [0], [1], [0, 0, 1, 1], [], []>} : vector<2x96xbf16>, vector<96x32xbf16>, vector<2x32xf32> -> vector<2x32xf32>
    %c0_22 = arith.constant 0 : index
    %c0_23 = arith.constant 0 : index
    %27 = vector.load %arg8[%c0_22, %c0_23] : memref<1x32xf32, #tpu.memory_space<vmem>>, vector<1x32xf32>
    %28 = vector.broadcast %27 : vector<1x32xf32> to vector<2x32xf32>
    %29 = arith.addf %26, %28 : vector<2x32xf32>
    %cst_24 = arith.constant 0.000000e+00 : f32
    %30 = vector.broadcast %cst_24 : f32 to vector<2x32xf32>
    %31 = arith.maximumf %29, %30 : vector<2x32xf32>
    %32 = arith.truncf %31 : vector<2x32xf32> to vector<2x32xbf16>
    %c0_25 = arith.constant 0 : index
    %c0_26 = arith.constant 0 : index
    %33 = vector.load %arg9[%c0_25, %c0_26] : memref<32x32xbf16, #tpu.memory_space<vmem>>, vector<32x32xbf16>
    %cst_27 = arith.constant dense<0.000000e+00> : vector<2x32xf32>
    %34 = tpu.matmul %32, %33, %cst_27 {dimension_numbers = #tpu.dot_dimension_numbers<[1], [0], [0], [1], [0, 0, 1, 1], [], []>} : vector<2x32xbf16>, vector<32x32xbf16>, vector<2x32xf32> -> vector<2x32xf32>
    %c0_28 = arith.constant 0 : index
    %c0_29 = arith.constant 0 : index
    %35 = vector.load %arg10[%c0_28, %c0_29] : memref<1x32xf32, #tpu.memory_space<vmem>>, vector<1x32xf32>
    %36 = vector.broadcast %35 : vector<1x32xf32> to vector<2x32xf32>
    %37 = arith.addf %34, %36 : vector<2x32xf32>
    %cst_30 = arith.constant 0.000000e+00 : f32
    %38 = vector.broadcast %cst_30 : f32 to vector<2x32xf32>
    %39 = arith.maximumf %37, %38 : vector<2x32xf32>
    %40 = vector.extract_strided_slice %23 {offsets = [0, 0], sizes = [2, 32], strides = [1, 1]} : vector<2x96xf32> to vector<2x32xf32>
    %41 = tpu.concatenate %39, %40 in 1 : vector<2x32xf32>, vector<2x32xf32> -> vector<2x64xf32>
    %c0_31 = arith.constant 0 : index
    %c0_32 = arith.constant 0 : index
    %42 = vector.load %arg11[%c0_31, %c0_32] : memref<2x64xf32, #tpu.memory_space<vmem>>, vector<2x64xf32>
    tpu.vector_store %arg11[%c0_31, %c0_32], %41 {strides = array<i32>} : memref<2x64xf32, #tpu.memory_space<vmem>>, vector<2x64xf32>,
    return
  }
}

</mosaic_0001>

<llo_original>
// kernel: tpu_custom_call.1
$region0: #{tpu_custom_call.1}
  #allocation0 [shape = 'u32[]', space=smem, size = 0x4, offset = 0x4, fixed_abs, tag = 'smem constant byte address 0x4 - core index']
  #allocation1 [shape = 'u32[72,128]{1,0:T(1,128)}', space=vmem, size = 0x9000, scoped, tag = 'internal scratch']
  %s0 = inlined_call_operand.vmem [shape: bf16[16,16], index: 0, kind: input, shape index: {}]
  %s1 = inlined_call_operand.hbm [shape: bf16[16,48], index: 1, kind: input, shape index: {}]
  %s2 = inlined_call_operand.vmem [shape: f32[16,32], index: 2, kind: input, shape index: {}]
  %s3 = inlined_call_operand.vmem [shape: f32[16,32], index: 3, kind: input, shape index: {}]
  %s4 = inlined_call_operand.vmem [shape: f32[16,96], index: 4, kind: input, shape index: {}]
  %s5 = inlined_call_operand.vmem [shape: bf16[48,32], index: 5, kind: input, shape index: {}]
  %s6 = inlined_call_operand.vmem [shape: bf16[32,32], index: 6, kind: input, shape index: {}]
  %s7 = inlined_call_operand.vmem [shape: bf16[96,32], index: 7, kind: input, shape index: {}]
  %s8 = inlined_call_operand.vmem [shape: f32[1,32], index: 8, kind: input, shape index: {}]
  %s9 = inlined_call_operand.vmem [shape: bf16[32,32], index: 9, kind: input, shape index: {}]
  %s10 = inlined_call_operand.vmem [shape: f32[1,32], index: 10, kind: input, shape index: {}]
  %s11 = inlined_call_operand.hbm [shape: f32[2,64], index: 11, kind: output, shape index: {}]
  %s12 = sld [smem:[#allocation0]]
  $region58: #{tpu_custom_call.1} parent=0
    _
  %s14 = ssub.s32 1, %s12
  %s15 = scalar_select 0, %s14, %s12
  $region1: #{tpu_custom_call.1} parent=0
    #allocation2 [shape = 'u8[4096]{0}', space=vmem, size = 0x1000, scoped, tag = 'input window, operand 1, single buffered']
    #allocation3 [shape = 's32[1]{0}', space=sflag, size = 0x4, scoped, tag = 'scoped memory for tpu_custom_call.1']
    #allocation4 [shape = 's32[1]{0}', space=sflag, size = 0x4, scoped, tag = 'scoped memory for tpu_custom_call.1']
    #allocation5 [shape = 'u8[1024]{0}', space=vmem, size = 0x400, scoped, tag = 'output window, operand 0, single buffered']
    %16 = vsyncpa [#allocation3], 0
    %17 = vsyncpa [#allocation4], 0
    // Predicated region
    $region2: #{tpu_custom_call.1} parent=1 // pred_check
      _
    $region3: #{tpu_custom_call.1} parent=1 // pred_check_branch
      %19 = sbr.rel (0) target = $region5
    $region4: #{tpu_custom_call.1} parent=1 // pred_region
      _
    $region5: #{tpu_custom_call.1} parent=1 // pred_fallthru
      _
    // Predicated region
    $region6: #{tpu_custom_call.1} parent=1 // pred_check
      _
    $region7: #{tpu_custom_call.1} parent=1 // pred_check_branch
      %21 = sbr.rel (0) target = $region9
    $region8: #{tpu_custom_call.1} parent=1 // pred_region
      %23 = vsyncadd [#allocation3], 0
      %s24 = sshll.u32 %s1, 4
      %s25 = int_to_ptr.hbm [resolvable:$true] %s24
      %s26 = sshll.u32 [#allocation2], 4
      %s27 = int_to_ptr.vmem [resolvable:$true] %s26
      %32 = dma.hbm_to_vmem [thread:$0]  %s25, 128, %s27, [#allocation3], 64, 64, 4
    $region9: #{tpu_custom_call.1} parent=1 // pred_fallthru
      _
    // Predicated region
    $region10: #{tpu_custom_call.1} parent=1 // pred_check
      _
    $region11: #{tpu_custom_call.1} parent=1 // pred_check_branch
      %34 = sbr.rel (0) target = $region13
    $region12: #{tpu_custom_call.1} parent=1 // pred_region
      _
    $region13: #{tpu_custom_call.1} parent=1 // pred_fallthru
      _
    // Predicated region
    $region14: #{tpu_custom_call.1} parent=1 // pred_check
      _
    $region15: #{tpu_custom_call.1} parent=1 // pred_check_branch
      %36 = sbr.rel (0) target = $region17
    $region16: #{tpu_custom_call.1} parent=1 // pred_region
      _
    $region17: #{tpu_custom_call.1} parent=1 // pred_fallthru
      _
    // Predicated region
    $region18: #{tpu_custom_call.1} parent=1 // pred_check
      _
    $region19: #{tpu_custom_call.1} parent=1 // pred_check_branch
      %38 = sbr.rel (0) target = $region21
    $region20: #{tpu_custom_call.1} parent=1 // pred_region
      _
    $region21: #{tpu_custom_call.1} parent=1 // pred_fallthru
      _
    // Predicated region
    $region22: #{tpu_custom_call.1} parent=1 // pred_check
      _
    $region23: #{tpu_custom_call.1} parent=1 // pred_check_branch
      %40 = sbr.rel (0) target = $region25
    $region24: #{tpu_custom_call.1} parent=1 // pred_region
      _
    $region25: #{tpu_custom_call.1} parent=1 // pred_fallthru
      _
    // Predicated region
    $region26: #{tpu_custom_call.1} parent=1 // pred_check
      _
    $region27: #{tpu_custom_call.1} parent=1 // pred_check_branch
      %42 = sbr.rel (0) target = $region29
    $region28: #{tpu_custom_call.1} parent=1 // pred_region
      _
    $region29: #{tpu_custom_call.1} parent=1 // pred_fallthru
      _
    // Predicated region
    $region30: #{tpu_custom_call.1} parent=1 // pred_check
      _
    $region31: #{tpu_custom_call.1} parent=1 // pred_check_branch
      %44 = sbr.rel (0) target = $region33
    $region32: #{tpu_custom_call.1} parent=1 // pred_region
      _
    $region33: #{tpu_custom_call.1} parent=1 // pred_fallthru
      _
    // Predicated region
    $region34: #{tpu_custom_call.1} parent=1 // pred_check
      _
    $region35: #{tpu_custom_call.1} parent=1 // pred_check_branch
      %46 = sbr.rel (0) target = $region37
    $region36: #{tpu_custom_call.1} parent=1 // pred_region
      _
    $region37: #{tpu_custom_call.1} parent=1 // pred_fallthru
      _
    // Predicated region
    $region38: #{tpu_custom_call.1} parent=1 // pred_check
      _
    $region39: #{tpu_custom_call.1} parent=1 // pred_check_branch
      %48 = sbr.rel (0) target = $region41
    $region40: #{tpu_custom_call.1} parent=1 // pred_region
      _
    $region41: #{tpu_custom_call.1} parent=1 // pred_fallthru
      _
    // Predicated region
    $region42: #{tpu_custom_call.1} parent=1 // pred_check
      _
    $region43: #{tpu_custom_call.1} parent=1 // pred_check_branch
      %50 = sbr.rel (0) target = $region45
    $region44: #{tpu_custom_call.1} parent=1 // pred_region
      _
    $region45: #{tpu_custom_call.1} parent=1 // pred_fallthru
      _
    // Predicated region
    $region46: #{tpu_custom_call.1} parent=1 // pred_check
      _
    $region47: #{tpu_custom_call.1} parent=1 // pred_check_branch
      %52 = sbr.rel (0) target = $region49
    $region48: #{tpu_custom_call.1} parent=1 // pred_region
      %54 = dma.done [#allocation3], 128
    $region49: #{tpu_custom_call.1} parent=1 // pred_fallthru
      _
    %v56 = vld [vmem:[%s0] sm:$0xf]
    %v57 = vld [vmem:[%s0 + $0x4] sm:$0xf]
    %v58 = vld [vmem:[#allocation2] sm:$0xf]
    %v59 = vld [vmem:[#allocation2 + $0x4] sm:$0xf]
    %v60 = vld [vmem:[%s5] sm:$0xf]
    %v61 = vld [vmem:[%s5 + $0x4] sm:$0xf]
    %v62 = vld [vmem:[%s5 + $0x8] sm:$0xf]
    %v63 = vld [vmem:[%s5 + $0xc] sm:$0xf]
    %v64 = vld [vmem:[%s5 + $0x10] sm:$0xf]
    %v65 = vld [vmem:[%s5 + $0x14] sm:$0xf]
    %v68 = vunpack.c.l.b16 %v58
    %v69 = vunpack.c.l.b16 %v59
    %v70 = vpack.c.b16 %v69, %v68
    %v77 = vunpack.c.l.b16 %v60
    %v78 = vunpack.c.l.b16 %v61
    %v79 = vunpack.c.l.b16 %v62
    %v80 = vunpack.c.l.b16 %v63
    %v81 = vunpack.c.l.b16 %v64
    %v82 = vunpack.c.l.b16 %v65
    %v83 = vpack.c.b16 %v78, %v77
    %v84 = vpack.c.b16 %v80, %v79
    %v85 = vpack.c.b16 %v82, %v81
    %vm89 = vcmask 392192
    %v91 = vsel %vm89, %v70, 0
    %93 = vmatpush.bf16.msra.mxu0 0
    %94 = vmatpush.bf16.msra.mxu0 0
    %95 = vmatpush.bf16.msra.mxu0 0
    %96 = vmatpush.bf16.msra.mxu0 0
    %97 = vmatpush.bf16.msra.mxu0 0
    %98 = vmatpush.bf16.msra.mxu0 %v85
    %99 = vmatpush.bf16.msra.mxu0 %v84
    %100 = vmatpush.bf16.msra.mxu0 %v83
    %101 = vmatmul.bf16.gmra.mxu0 %v91
    %v102 = vpop.f32.mrf.mxu0
    %v103 = vadd.f32 0.0, %v102
    %v104 = vpop.f32.mrf.mxu0
    %v105 = vadd.f32 0.0, %v104
    %106 = vdwg.mxu0
    %v107 = vpack.c.bf16 %v105, %v103
    %v108 = vld [vmem:[%s2] sm:$0xff]
    %v109 = vld [vmem:[%s2 + $0x8] sm:$0xff]
    %v112 = vunpack.c.l.b16 %v56
    %v113 = vunpack.c.l.b16 %v57
    %v114 = vpack.c.b16 %v113, %v112
    %vm115 = vcmask 130048
    %v117 = vsel %vm115, %v114, 0
    %119 = vmatpush.bf16.msra.mxu0 0
    %120 = vmatpush.bf16.msra.mxu0 0
    %121 = vmatpush.bf16.msra.mxu0 0
    %122 = vmatpush.bf16.msra.mxu0 0
    %123 = vmatpush.bf16.msra.mxu0 0
    %124 = vmatpush.bf16.msra.mxu0 0
    %125 = vmatpush.bf16.msra.mxu0 0
    %126 = vmatpush.bf16.msra.mxu0 %v107
    %127 = vmatmul.bf16.gmra.mxu0 %v117
    %v128 = vpop.f32.mrf.mxu0
    %v129 = vadd.f32 %v108, %v128
    %v130 = vpop.f32.mrf.mxu0
    %v131 = vadd.f32 %v109, %v130
    %132 = vdwg.mxu0
    %v133 = vmax.f32 %v129, 0.0
    %v134 = vmax.f32 %v131, 0.0
    %v135 = vpack.c.bf16 %v134, %v133
    %v136 = vld [vmem:[%s6] sm:$0xf]
    %v137 = vld [vmem:[%s6 + $0x4] sm:$0xf]
    %v138 = vld [vmem:[%s6 + $0x8] sm:$0xf]
    %v139 = vld [vmem:[%s6 + $0xc] sm:$0xf]
    %v144 = vunpack.c.l.b16 %v136
    %v145 = vunpack.c.l.b16 %v137
    %v146 = vunpack.c.l.b16 %v138
    %v147 = vunpack.c.l.b16 %v139
    %v148 = vpack.c.b16 %v145, %v144
    %v149 = vpack.c.b16 %v147, %v146
    %vm152 = vcmask 261120
    %v154 = vsel %vm152, %v135, 0
    %156 = vmatpush.bf16.msra.mxu0 0
    %157 = vmatpush.bf16.msra.mxu0 0
    %158 = vmatpush.bf16.msra.mxu0 0
    %159 = vmatpush.bf16.msra.mxu0 0
    %160 = vmatpush.bf16.msra.mxu0 0
    %161 = vmatpush.bf16.msra.mxu0 0
    %162 = vmatpush.bf16.msra.mxu0 %v149
    %163 = vmatpush.bf16.msra.mxu0 %v148
    %164 = vmatmul.bf16.gmra.mxu0 %v154
    %v165 = vpop.f32.mrf.mxu0
    %v166 = vadd.f32 0.0, %v165
    %v167 = vpop.f32.mrf.mxu0
    %v168 = vadd.f32 0.0, %v167
    %169 = vdwg.mxu0
    %v170 = vpack.c.bf16 %v168, %v166
    %v171 = vld [vmem:[%s3] sm:$0xff]
    %v172 = vld [vmem:[%s3 + $0x8] sm:$0xff]
    %173 = vmatpush.bf16.msra.mxu0 0
    %174 = vmatpush.bf16.msra.mxu0 0
    %175 = vmatpush.bf16.msra.mxu0 0
    %176 = vmatpush.bf16.msra.mxu0 0
    %177 = vmatpush.bf16.msra.mxu0 0
    %178 = vmatpush.bf16.msra.mxu0 0
    %179 = vmatpush.bf16.msra.mxu0 0
    %180 = vmatpush.bf16.msra.mxu0 %v170
    %181 = vmatmul.bf16.gmra.mxu0 %v117
    %v182 = vpop.f32.mrf.mxu0
    %v183 = vadd.f32 %v171, %v182
    %v184 = vpop.f32.mrf.mxu0
    %v185 = vadd.f32 %v172, %v184
    %186 = vdwg.mxu0
    %v187 = vmax.f32 %v183, 0.0
    %v188 = vmax.f32 %v185, 0.0
    %191 = vrot.lane.b32.xlu0 %v187, 32
    %v192 = vpop.permute.xlu0 %191
    %193 = vrot.lane.b32.xlu0 %v188, 32
    %v194 = vpop.permute.xlu0 %193
    %197 = vrot.lane.b32.xlu0 %v187, 64
    %v198 = vpop.permute.xlu0 %197
    %199 = vrot.lane.b32.xlu0 %v188, 64
    %v200 = vpop.permute.xlu0 %199
    %v203 = vsel %vm152, %v187, %v192
    %v204 = vsel %vm152, %v188, %v194
    %vm205 = vcmask 523264
    %v206 = vsel %vm205, %v203, %v198
    %v207 = vsel %vm205, %v204, %v200
    %v208 = vld [vmem:[%s4] sm:$0xff]
    %v209 = vld [vmem:[%s4 + $0x8] sm:$0xff]
    %v210 = vadd.f32 %v206, %v208
    %v211 = vadd.f32 %v207, %v209
    %vm212 = vcmask 785408
    %v213 = vsel %vm212, %v210, -inf
    %v214 = vrot.slane %v213, 4
    %v215 = vmax.f32 %v213, %v214
    %v216 = vrot.slane %v215, 2
    %v217 = vmax.f32 %v215, %v216
    %v218 = vrot.slane %v217, 1
    %v219 = vmax.f32 %v217, %v218
    %v220 = vsel %vm212, %v211, -inf
    %v221 = vrot.slane %v220, 4
    %v222 = vmax.f32 %v220, %v221
    %v223 = vrot.slane %v222, 2
    %v224 = vmax.f32 %v222, %v223
    %v225 = vrot.slane %v224, 1
    %v226 = vmax.f32 %v224, %v225
    %v227 = vpack.c.bf16 %v219, %v219
    %v228 = vpack.c.bf16 %v226, %v226
    %v229 = vld [vmem:[%s7] sm:$0xf]
    %v230 = vld [vmem:[%s7 + $0x4] sm:$0xf]
    %v231 = vld [vmem:[%s7 + $0x8] sm:$0xf]
    %v232 = vld [vmem:[%s7 + $0xc] sm:$0xf]
    %v233 = vld [vmem:[%s7 + $0x10] sm:$0xf]
    %v234 = vld [vmem:[%s7 + $0x14] sm:$0xf]
    %v235 = vld [vmem:[%s7 + $0x18] sm:$0xf]
    %v236 = vld [vmem:[%s7 + $0x1c] sm:$0xf]
    %v237 = vld [vmem:[%s7 + $0x20] sm:$0xf]
    %v238 = vld [vmem:[%s7 + $0x24] sm:$0xf]
    %v239 = vld [vmem:[%s7 + $0x28] sm:$0xf]
    %v240 = vld [vmem:[%s7 + $0x2c] sm:$0xf]
    %v241 = vld [vmem:[%s8] sm:$0x1]
    %v243 = vperm.slane %v241, 0
    %v247 = vunpack.c.l.b16 %v227
    %v248 = vunpack.c.l.b16 %v228
    %vm249 = vcmask 1041409
    %v250 = vsel %vm249, %v248, %v247
    %v251 = vpack.c.b16 %v250, %v250
    %v264 = vunpack.c.l.b16 %v229
    %v265 = vunpack.c.l.b16 %v230
    %v266 = vunpack.c.l.b16 %v231
    %v267 = vunpack.c.l.b16 %v232
    %v268 = vunpack.c.l.b16 %v233
    %v269 = vunpack.c.l.b16 %v234
    %v270 = vunpack.c.l.b16 %v235
    %v271 = vunpack.c.l.b16 %v236
    %v272 = vunpack.c.l.b16 %v237
    %v273 = vunpack.c.l.b16 %v238
    %v274 = vunpack.c.l.b16 %v239
    %v275 = vunpack.c.l.b16 %v240
    %v276 = vpack.c.b16 %v265, %v264
    %v277 = vpack.c.b16 %v267, %v266
    %v278 = vpack.c.b16 %v269, %v268
    %v279 = vpack.c.b16 %v271, %v270
    %v280 = vpack.c.b16 %v273, %v272
    %v281 = vpack.c.b16 %v275, %v274
    %v289 = vsel %vm212, %v251, 0
    %291 = vmatpush.bf16.msra.mxu0 0
    %292 = vmatpush.bf16.msra.mxu0 0
    %293 = vmatpush.bf16.msra.mxu0 %v281
    %294 = vmatpush.bf16.msra.mxu0 %v280
    %295 = vmatpush.bf16.msra.mxu0 %v279
    %296 = vmatpush.bf16.msra.mxu0 %v278
    %297 = vmatpush.bf16.msra.mxu0 %v277
    %298 = vmatpush.bf16.msra.mxu0 %v276
    %299 = vmatmul.bf16.gmra.mxu0 %v289
    %v300 = vpop.f32.mrf.mxu0
    %v301 = vadd.f32 %v243, %v300
    %v302 = vpop.f32.mrf.mxu0
    %303 = vdwg.mxu0
    %v304 = vmax.f32 %v301, 0.0
    %v305 = vpack.c.bf16 %v304, %v304
    %v306 = vld [vmem:[%s9] sm:$0xf]
    %v307 = vld [vmem:[%s9 + $0x4] sm:$0xf]
    %v308 = vld [vmem:[%s9 + $0x8] sm:$0xf]
    %v309 = vld [vmem:[%s9 + $0xc] sm:$0xf]
    %v310 = vld [vmem:[%s10] sm:$0x1]
    %v312 = vperm.slane %v310, 0
    %v318 = vunpack.c.l.b16 %v306
    %v319 = vunpack.c.l.b16 %v307
    %v320 = vunpack.c.l.b16 %v308
    %v321 = vunpack.c.l.b16 %v309
    %v322 = vpack.c.b16 %v319, %v318
    %v323 = vpack.c.b16 %v321, %v320
    %v327 = vsel %vm152, %v305, 0
    %329 = vmatpush.bf16.msra.mxu0 0
    %330 = vmatpush.bf16.msra.mxu0 0
    %331 = vmatpush.bf16.msra.mxu0 0
    %332 = vmatpush.bf16.msra.mxu0 0
    %333 = vmatpush.bf16.msra.mxu0 0
    %334 = vmatpush.bf16.msra.mxu0 0
    %335 = vmatpush.bf16.msra.mxu0 %v323
    %336 = vmatpush.bf16.msra.mxu0 %v322
    %337 = vmatmul.bf16.gmra.mxu0 %v327
    %v338 = vpop.f32.mrf.mxu0
    %v339 = vadd.f32 %v312, %v338
    %v340 = vpop.f32.mrf.mxu0
    %341 = vdwg.mxu0
    %v342 = vmax.f32 %v339, 0.0
    %v345 = vsel %vm249, %v226, %v219
    %346 = vrot.lane.b32.xlu0 %v345, 32
    %v347 = vpop.permute.xlu0 %346
    %v349 = vsel %vm152, %v342, %v347
    %vm350 = vcmask 517120
    %351 = vst.msk [vmem:[#allocation5] sm:$0x3] %vm350, %v349
    // Predicated region
    $region50: #{tpu_custom_call.1} parent=1 // pred_check
      _
    $region51: #{tpu_custom_call.1} parent=1 // pred_check_branch
      %353 = sbr.rel (0) target = $region53
    $region52: #{tpu_custom_call.1} parent=1 // pred_region
      %355 = vsyncadd [#allocation4], 0
      %s357 = sshll.u32 [#allocation5], 4
      %s358 = int_to_ptr.vmem [resolvable:$true] %s357
      %s359 = sshll.u32 %s11, 4
      %s360 = int_to_ptr.hbm [resolvable:$true] %s359
      %362 = dma.vmem_to_hbm [thread:$0]  %s358, 32, %s360, [#allocation4]
    $region53: #{tpu_custom_call.1} parent=1 // pred_fallthru
      _
    // Predicated region
    $region54: #{tpu_custom_call.1} parent=1 // pred_check
      _
    $region55: #{tpu_custom_call.1} parent=1 // pred_check_branch
      %364 = sbr.rel (0) target = $region57
    $region56: #{tpu_custom_call.1} parent=1 // pred_region
      %366 = dma.done [#allocation4], 32
    $region57: #{tpu_custom_call.1} parent=1 // pred_fallthru
      _
    %367 = vsyncpa [#allocation3], 1
    %368 = vsyncpa [#allocation4], 1

</llo_original>
